<compile_context>
chip_gen: v6e
topology: v6e:2x2x1
jax: 0.10.0
libtpu: 0.0.40
codegen_flags: <defaults>
</compile_context>

<pallas_src>
import math

import jax
import jax.numpy as jnp
from jax.experimental import pallas as pl
from jax.experimental.pallas import tpu as pltpu


def _mlp_kernel(x_ref,
                w1_ref, b1_ref,
                w2_ref, b2_ref,
                w3_ref, b3_ref,
                w4_ref, b4_ref,
                o_ref):
    """Fused forward pass on one (features, Btile) activation tile.

    Shapes (feature-major / batch-on-lanes):
      x_ref : (3,  Bt)      o_ref : (1, Bt)
      w1: (24, 3)  b1: (24, 1)     w2: (40, 24)  b2: (40, 1)
      w3: (12, 40) b3: (12, 1)     w4: (1, 12)   b4: (1, 1)
    """
    xT = x_ref[...]                                            # (3, Bt) f32

    # ---- layer 1: 3 -> 24.  K=3 contraction -> VPU broadcast-FMAs, no MXU.
    w1 = w1_ref[...]                                           # (24, 3)
    h1 = (w1[:, 0:1] * xT[0:1, :]
          + w1[:, 1:2] * xT[1:2, :]
          + w1[:, 2:3] * xT[2:3, :]
          + b1_ref[...])
    h1 = jnp.maximum(h1, 0.0)                                  # (24, Bt)

    # ---- layer 2: 24 -> 40 (MXU, f32 accumulation).
    h2 = jnp.dot(w2_ref[...], h1,
                 preferred_element_type=jnp.float32) + b2_ref[...]
    h2 = jnp.maximum(h2, 0.0)                                  # (40, Bt)

    # ---- layer 3: 40 -> 12 (MXU, f32 accumulation).
    h3 = jnp.dot(w3_ref[...], h2,
                 preferred_element_type=jnp.float32) + b3_ref[...]
    h3 = jnp.maximum(h3, 0.0)                                  # (12, Bt)

    # ---- output layer: 12 -> 1.  VPU multiply + sublane (XLU) reduce.
    w4 = w4_ref[...]                                           # (1, 12)
    out = jnp.sum(w4.T * h3, axis=0, keepdims=True) + b4_ref[...]
    o_ref[...] = out                                           # (1, Bt)


def net_forward(x, params, *, batch_tile=128):
    """x: (B, 3) float32 (PyTorch convention).  Returns (B, 1) float32."""
    B = x.shape[0]
    n_tiles = pl.cdiv(B, batch_tile)
    Bp = n_tiles * batch_tile

    xT = x.T                                                   # (3, B) lane-dense
    if Bp != B:
        xT = jnp.pad(xT, ((0, 0), (0, Bp - B)))                # pad batch to tile

    out_t = pl.pallas_call(
        _mlp_kernel,
        out_shape=jax.ShapeDtypeStruct((1, Bp), jnp.float32),
        grid_spec=pltpu.PrefetchScalarGridSpec(
            num_scalar_prefetch=0,
            grid=(n_tiles,),
            in_specs=[
                # activations: tiled over batch (lanes)
                pl.BlockSpec((3, batch_tile), lambda i: (0, i)),
                # weights / biases: constant block index -> stay VMEM-resident
                pl.BlockSpec((24, 3), lambda i: (0, 0)),
                pl.BlockSpec((24, 1), lambda i: (0, 0)),
                pl.BlockSpec((40, 24), lambda i: (0, 0)),
                pl.BlockSpec((40, 1), lambda i: (0, 0)),
                pl.BlockSpec((12, 40), lambda i: (0, 0)),
                pl.BlockSpec((12, 1), lambda i: (0, 0)),
                pl.BlockSpec((1, 12), lambda i: (0, 0)),
                pl.BlockSpec((1, 1), lambda i: (0, 0)),
            ],
            out_specs=pl.BlockSpec((1, batch_tile), lambda i: (0, i)),
        ),
        compiler_params=pltpu.CompilerParams(
            dimension_semantics=("parallel",),   # shards batch across TCs (v7x)
        ),
    )(xT,
      params["w1"], params["b1"],
      params["w2"], params["b2"],
      params["w3"], params["b3"],
      params["w4"], params["b4"])

    return out_t[:, :B].T                                      # (B, 1)


def init_params(key):
    """nn.Linear-style init: U(-1/sqrt(fan_in), +1/sqrt(fan_in)).

    Weights stored in PyTorch layout (out_features, in_features) so the kernel
    computes  W @ x_T  directly; biases stored as (out_features, 1) columns.
    """
    dims = [(3, 24), (24, 40), (40, 12), (12, 1)]
    params = {}
    for i, (fan_in, fan_out) in enumerate(dims, start=1):
        key, kw, kb = jax.random.split(key, 3)
        bound = 1.0 / math.sqrt(fan_in)
        params[f"w{i}"] = jax.random.uniform(
            kw, (fan_out, fan_in), jnp.float32, minval=-bound, maxval=bound)
        params[f"b{i}"] = jax.random.uniform(
            kb, (fan_out, 1), jnp.float32, minval=-bound, maxval=bound)
    return params


if __name__ == "__main__":
    key = jax.random.PRNGKey(0)
    kp, kx = jax.random.split(key)

    params = init_params(kp)
    B = 300                                   # exercises grid (3 tiles) + padding
    x = jax.random.normal(kx, (B, 3), jnp.float32)

    y = net_forward(x, params, batch_tile=128)
    jax.block_until_ready(y)

    # Plain-JAX reference (PyTorch semantics: y = x @ W.T + b).
    def ref(x, p):
        h = jnp.maximum(x @ p["w1"].T + p["b1"].T, 0.0)
        h = jnp.maximum(h @ p["w2"].T + p["b2"].T, 0.0)
        h = jnp.maximum(h @ p["w3"].T + p["b3"].T, 0.0)
        return h @ p["w4"].T + p["b4"].T

    y_ref = ref(x, params)
    assert y.shape == (B, 1)
    assert jnp.allclose(y, y_ref, atol=1e-5, rtol=1e-5)
    print("KERNEL_OK")
</pallas_src>

<mosaic_0001>
module attributes {stable_mosaic.version = 11 : i64} {
  func.func @_mlp_kernel(%arg0: i32, %arg1: memref<3x128xf32, #tpu.memory_space<vmem>>, %arg2: memref<24x3xf32, #tpu.memory_space<vmem>>, %arg3: memref<24x1xf32, #tpu.memory_space<vmem>>, %arg4: memref<40x24xf32, #tpu.memory_space<vmem>>, %arg5: memref<40x1xf32, #tpu.memory_space<vmem>>, %arg6: memref<12x40xf32, #tpu.memory_space<vmem>>, %arg7: memref<12x1xf32, #tpu.memory_space<vmem>>, %arg8: memref<1x12xf32, #tpu.memory_space<vmem>>, %arg9: memref<1x1xf32, #tpu.memory_space<vmem>>, %arg10: memref<1x128xf32, #tpu.memory_space<vmem>>) attributes {dimension_semantics = [#tpu.dimension_semantics<parallel>], iteration_bounds = array<i64: 3>, scalar_prefetch = 0 : i64, scratch_operands = 0 : i64, tpu.core_type = #tpu.core_type<tc>, window_params = [{transform_indices = @transform_0, window_bounds = array<i64: 3, 128>}, {pipeline_mode = #tpu.pipeline_mode<synchronous>, transform_indices = @transform_1, window_bounds = array<i64: 24, 3>}, {pipeline_mode = #tpu.pipeline_mode<synchronous>, transform_indices = @transform_2, window_bounds = array<i64: 24, 1>}, {pipeline_mode = #tpu.pipeline_mode<synchronous>, transform_indices = @transform_3, window_bounds = array<i64: 40, 24>}, {pipeline_mode = #tpu.pipeline_mode<synchronous>, transform_indices = @transform_4, window_bounds = array<i64: 40, 1>}, {pipeline_mode = #tpu.pipeline_mode<synchronous>, transform_indices = @transform_5, window_bounds = array<i64: 12, 40>}, {pipeline_mode = #tpu.pipeline_mode<synchronous>, transform_indices = @transform_6, window_bounds = array<i64: 12, 1>}, {pipeline_mode = #tpu.pipeline_mode<synchronous>, transform_indices = @transform_7, window_bounds = array<i64: 1, 12>}, {pipeline_mode = #tpu.pipeline_mode<synchronous>, transform_indices = @transform_8, window_bounds = array<i64: 1, 1>}, {transform_indices = @transform_9, window_bounds = array<i64: 1, 128>}]} {
    %c0 = arith.constant 0 : index
    %c0_0 = arith.constant 0 : index
    %0 = vector.load %arg1[%c0, %c0_0] : memref<3x128xf32, #tpu.memory_space<vmem>>, vector<3x128xf32>
    %c0_1 = arith.constant 0 : index
    %c0_2 = arith.constant 0 : index
    %1 = vector.load %arg2[%c0_1, %c0_2] : memref<24x3xf32, #tpu.memory_space<vmem>>, vector<24x3xf32>
    %2 = vector.extract_strided_slice %1 {offsets = [0, 0], sizes = [24, 1], strides = [1, 1]} : vector<24x3xf32> to vector<24x1xf32>
    %3 = vector.extract_strided_slice %0 {offsets = [0, 0], sizes = [1, 128], strides = [1, 1]} : vector<3x128xf32> to vector<1x128xf32>
    %4 = vector.broadcast %2 : vector<24x1xf32> to vector<24x128xf32>
    %5 = vector.broadcast %3 : vector<1x128xf32> to vector<24x128xf32>
    %6 = arith.mulf %4, %5 : vector<24x128xf32>
    %7 = vector.extract_strided_slice %1 {offsets = [0, 1], sizes = [24, 1], strides = [1, 1]} : vector<24x3xf32> to vector<24x1xf32>
    %8 = vector.extract_strided_slice %0 {offsets = [1, 0], sizes = [1, 128], strides = [1, 1]} : vector<3x128xf32> to vector<1x128xf32>
    %9 = vector.broadcast %7 : vector<24x1xf32> to vector<24x128xf32>
    %10 = vector.broadcast %8 : vector<1x128xf32> to vector<24x128xf32>
    %11 = arith.mulf %9, %10 : vector<24x128xf32>
    %12 = arith.addf %6, %11 : vector<24x128xf32>
    %13 = vector.extract_strided_slice %1 {offsets = [0, 2], sizes = [24, 1], strides = [1, 1]} : vector<24x3xf32> to vector<24x1xf32>
    %14 = vector.extract_strided_slice %0 {offsets = [2, 0], sizes = [1, 128], strides = [1, 1]} : vector<3x128xf32> to vector<1x128xf32>
    %15 = vector.broadcast %13 : vector<24x1xf32> to vector<24x128xf32>
    %16 = vector.broadcast %14 : vector<1x128xf32> to vector<24x128xf32>
    %17 = arith.mulf %15, %16 : vector<24x128xf32>
    %18 = arith.addf %12, %17 : vector<24x128xf32>
    %c0_3 = arith.constant 0 : index
    %c0_4 = arith.constant 0 : index
    %19 = vector.load %arg3[%c0_3, %c0_4] : memref<24x1xf32, #tpu.memory_space<vmem>>, vector<24x1xf32>
    %20 = vector.broadcast %19 : vector<24x1xf32> to vector<24x128xf32>
    %21 = arith.addf %18, %20 : vector<24x128xf32>
    %cst = arith.constant 0.000000e+00 : f32
    %22 = vector.broadcast %cst : f32 to vector<24x128xf32>
    %23 = arith.maximumf %21, %22 : vector<24x128xf32>
    %c0_5 = arith.constant 0 : index
    %c0_6 = arith.constant 0 : index
    %24 = vector.load %arg4[%c0_5, %c0_6] : memref<40x24xf32, #tpu.memory_space<vmem>>, vector<40x24xf32>
    %cst_7 = arith.constant dense<0.000000e+00> : vector<40x128xf32>
    %25 = tpu.matmul %24, %23, %cst_7 {dimension_numbers = #tpu.dot_dimension_numbers<[1], [0], [0], [1], [0, 0, 1, 1], [], []>} : vector<40x24xf32>, vector<24x128xf32>, vector<40x128xf32> -> vector<40x128xf32>
    %c0_8 = arith.constant 0 : index
    %c0_9 = arith.constant 0 : index
    %26 = vector.load %arg5[%c0_8, %c0_9] : memref<40x1xf32, #tpu.memory_space<vmem>>, vector<40x1xf32>
    %27 = vector.broadcast %26 : vector<40x1xf32> to vector<40x128xf32>
    %28 = arith.addf %25, %27 : vector<40x128xf32>
    %cst_10 = arith.constant 0.000000e+00 : f32
    %29 = vector.broadcast %cst_10 : f32 to vector<40x128xf32>
    %30 = arith.maximumf %28, %29 : vector<40x128xf32>
    %c0_11 = arith.constant 0 : index
    %c0_12 = arith.constant 0 : index
    %31 = vector.load %arg6[%c0_11, %c0_12] : memref<12x40xf32, #tpu.memory_space<vmem>>, vector<12x40xf32>
    %cst_13 = arith.constant dense<0.000000e+00> : vector<12x128xf32>
    %32 = tpu.matmul %31, %30, %cst_13 {dimension_numbers = #tpu.dot_dimension_numbers<[1], [0], [0], [1], [0, 0, 1, 1], [], []>} : vector<12x40xf32>, vector<40x128xf32>, vector<12x128xf32> -> vector<12x128xf32>
    %c0_14 = arith.constant 0 : index
    %c0_15 = arith.constant 0 : index
    %33 = vector.load %arg7[%c0_14, %c0_15] : memref<12x1xf32, #tpu.memory_space<vmem>>, vector<12x1xf32>
    %34 = vector.broadcast %33 : vector<12x1xf32> to vector<12x128xf32>
    %35 = arith.addf %32, %34 : vector<12x128xf32>
    %cst_16 = arith.constant 0.000000e+00 : f32
    %36 = vector.broadcast %cst_16 : f32 to vector<12x128xf32>
    %37 = arith.maximumf %35, %36 : vector<12x128xf32>
    %c0_17 = arith.constant 0 : index
    %c0_18 = arith.constant 0 : index
    %38 = vector.load %arg8[%c0_17, %c0_18] : memref<1x12xf32, #tpu.memory_space<vmem>>, vector<1x12xf32>
    %39 = tpu.transpose %38, [1, 0] : vector<1x12xf32> -> vector<12x1xf32>
    %40 = vector.broadcast %39 : vector<12x1xf32> to vector<12x128xf32>
    %41 = arith.mulf %40, %37 : vector<12x128xf32>
    %cst_19 = arith.constant dense<0.000000e+00> : vector<128xf32>
    %42 = vector.multi_reduction <add>, %41, %cst_19 [0] : vector<12x128xf32> to vector<128xf32>
    %43 = vector.shape_cast %42 : vector<128xf32> to vector<1x128xf32>
    %c0_20 = arith.constant 0 : index
    %c0_21 = arith.constant 0 : index
    %44 = vector.load %arg9[%c0_20, %c0_21] : memref<1x1xf32, #tpu.memory_space<vmem>>, vector<1x1xf32>
    %45 = vector.broadcast %44 : vector<1x1xf32> to vector<1x128xf32>
    %46 = arith.addf %43, %45 : vector<1x128xf32>
    %c0_22 = arith.constant 0 : index
    %c0_23 = arith.constant 0 : index
    %47 = vector.load %arg10[%c0_22, %c0_23] : memref<1x128xf32, #tpu.memory_space<vmem>>, vector<1x128xf32>
    tpu.vector_store %arg10[%c0_22, %c0_23], %46 {strides = array<i32>} : memref<1x128xf32, #tpu.memory_space<vmem>>, vector<1x128xf32>,
    return
  }
  func.func @transform_0(%arg0: i32) -> (i32, i32) {
    %c0_i32 = arith.constant 0 : i32
    %c0_i32_0 = arith.constant 0 : i32
    return %c0_i32, %arg0 : i32, i32
  }
  func.func @transform_1(%arg0: i32) -> (i32, i32) {
    %c0_i32 = arith.constant 0 : i32
    %c0_i32_0 = arith.constant 0 : i32
    %c0_i32_1 = arith.constant 0 : i32
    return %c0_i32, %c0_i32_0 : i32, i32
  }
  func.func @transform_2(%arg0: i32) -> (i32, i32) {
    %c0_i32 = arith.constant 0 : i32
    %c0_i32_0 = arith.constant 0 : i32
    %c0_i32_1 = arith.constant 0 : i32
    return %c0_i32, %c0_i32_0 : i32, i32
  }
  func.func @transform_3(%arg0: i32) -> (i32, i32) {
    %c0_i32 = arith.constant 0 : i32
    %c0_i32_0 = arith.constant 0 : i32
    %c0_i32_1 = arith.constant 0 : i32
    return %c0_i32, %c0_i32_0 : i32, i32
  }
  func.func @transform_4(%arg0: i32) -> (i32, i32) {
    %c0_i32 = arith.constant 0 : i32
    %c0_i32_0 = arith.constant 0 : i32
    %c0_i32_1 = arith.constant 0 : i32
    return %c0_i32, %c0_i32_0 : i32, i32
  }
  func.func @transform_5(%arg0: i32) -> (i32, i32) {
    %c0_i32 = arith.constant 0 : i32
    %c0_i32_0 = arith.constant 0 : i32
    %c0_i32_1 = arith.constant 0 : i32
    return %c0_i32, %c0_i32_0 : i32, i32
  }
  func.func @transform_6(%arg0: i32) -> (i32, i32) {
    %c0_i32 = arith.constant 0 : i32
    %c0_i32_0 = arith.constant 0 : i32
    %c0_i32_1 = arith.constant 0 : i32
    return %c0_i32, %c0_i32_0 : i32, i32
  }
  func.func @transform_7(%arg0: i32) -> (i32, i32) {
    %c0_i32 = arith.constant 0 : i32
    %c0_i32_0 = arith.constant 0 : i32
    %c0_i32_1 = arith.constant 0 : i32
    return %c0_i32, %c0_i32_0 : i32, i32
  }
  func.func @transform_8(%arg0: i32) -> (i32, i32) {
    %c0_i32 = arith.constant 0 : i32
    %c0_i32_0 = arith.constant 0 : i32
    %c0_i32_1 = arith.constant 0 : i32
    return %c0_i32, %c0_i32_0 : i32, i32
  }
  func.func @transform_9(%arg0: i32) -> (i32, i32) {
    %c0_i32 = arith.constant 0 : i32
    %c0_i32_0 = arith.constant 0 : i32
    return %c0_i32, %arg0 : i32, i32
  }
}

</mosaic_0001>

<llo_original>
// kernel: tpu_custom_call.1
$region0: #{tpu_custom_call.1}
  #allocation0 [shape = 'u32[]', space=smem, size = 0x4, offset = 0x4, fixed_abs, tag = 'smem constant byte address 0x4 - core index']
  #allocation1 [shape = 'u32[144,128]{1,0:T(1,128)}', space=vmem, size = 0x12000, scoped, tag = 'internal scratch']
  #allocation2 [shape = 'f32[1,1]{1,0:T(1,128)S(1)}', space=vmem, size = 0x200, scoped, tag = 'scoped memory for tpu_custom_call.1']
  %s0 = inlined_call_operand.vmem [shape: f32[3,384], index: 0, kind: input, shape index: {}]
  %s1 = inlined_call_operand.vmem [shape: f32[24,3], index: 1, kind: input, shape index: {}]
  %s2 = inlined_call_operand.vmem [shape: f32[24,1], index: 2, kind: input, shape index: {}]
  %s3 = inlined_call_operand.vmem [shape: f32[40,24], index: 3, kind: input, shape index: {}]
  %s4 = inlined_call_operand.vmem [shape: f32[40,1], index: 4, kind: input, shape index: {}]
  %s5 = inlined_call_operand.vmem [shape: f32[12,40], index: 5, kind: input, shape index: {}]
  %s6 = inlined_call_operand.vmem [shape: f32[12,1], index: 6, kind: input, shape index: {}]
  %s7 = inlined_call_operand.vmem [shape: f32[1,12], index: 7, kind: input, shape index: {}]
  %s8 = inlined_call_operand.<no memory space> [shape: f32[1,1], index: 8, kind: input, shape index: {}]
  %s9 = inlined_call_operand.hbm [shape: f32[1,384], index: 9, kind: output, shape index: {}]
  %s10 = sld [smem:[#allocation0]]
  $region69: #{tpu_custom_call.1} parent=0
    _
  %s12 = ssub.s32 1, %s10
  %s13 = scalar_select 0, %s12, %s10
  %v14 = vstv %s8
  %15 = vst [vmem:[#allocation2] sm:$0x1] %v14
  $region1: #{tpu_custom_call.1} parent=0
    #allocation3 [shape = 'u8[1024]{0}', space=vmem, size = 0x400, scoped, tag = 'output window, operand 0']
    #allocation4 [shape = 's32[2]{0}', space=sflag, size = 0x8, scoped, tag = 'scoped memory for tpu_custom_call.1']
    %16 = vsyncpa [#allocation4], 0
    %s17 = scalar_lea.sflag [#allocation4], 1
    %18 = vsyncpa %s17, 0
    loop: start=0, step=1, limit=5
    $region2: #{tpu_custom_call.1} parent=1 // loop_pre_header
      _
    $region3: #{tpu_custom_call.1} parent=1 // loop_header
      %s20 = sphi 0, %s24
      %p21 = scmp.ge.s32.totalorder %s20, 5
      %s30 = sphi 0, %s32
      %s33 = sphi 0, %s30
      %s34 = sphi 0, %s33
      %s50 = sphi 0, %s34
      %s54 = sphi 0, %s54
      %s56 = sphi 0, %s54
      %s57 = sphi 0, %s56
      %s71 = sphi 0, %s57
      %s75 = sphi 0, %s75
      %s77 = sphi 0, %s75
      %s78 = sphi 0, %s77
      %s92 = sphi 0, %s78
      %s96 = sphi 0, %s96
      %s98 = sphi 0, %s96
      %s99 = sphi 0, %s98
      %s113 = sphi 0, %s99
      %s117 = sphi 0, %s117
      %s119 = sphi 0, %s117
      %s120 = sphi 0, %s119
      %s134 = sphi 0, %s120
      %s138 = sphi 0, %s138
      %s140 = sphi 0, %s138
      %s141 = sphi 0, %s140
      %s155 = sphi 0, %s141
      %s159 = sphi 0, %s159
      %s161 = sphi 0, %s159
      %s162 = sphi 0, %s161
      %s176 = sphi 0, %s162
      %s180 = sphi 0, %s180
      %s182 = sphi 0, %s180
      %s183 = sphi 0, %s182
      %s197 = sphi 0, %s183
      %s201 = sphi 0, %s201
      %s203 = sphi 0, %s201
      %s204 = sphi 0, %s203
      %s218 = sphi 0, %s204
      %s224 = sphi 0, %s226
      %s227 = sphi 0, %s224
      %s228 = sphi 0, %s227
      %s244 = sphi 0, %s228
    $region4: #{tpu_custom_call.1} parent=1 // loop_header_branch
      %23 = sbr.rel (%p21) target = $region8
    $region5: #{tpu_custom_call.1} parent=1 // loop_body
      %s25 = ssub.s32 %s20, 1
      %s26 = ssub.s32 %s20, 2
      %s27 = sadd.s32 %s20, 1
      %s28 = ssub.s32 %s20, %s27
      %p29 = scmp.eq.s32.totalorder %s28, 0
      %s31 = sadd.s32 %s30, 1
      %s32 = scalar_select %p29, %s30, %s31
      %p35 = pneg %p29
      %p36 = scmp.eq.s32.totalorder %s20, 2
      %p37 = por %p35, %p36
      %p38 = scmp.ne.s32.totalorder %s30, %s33
      %p39 = scmp.eq.s32.totalorder %s20, 0
      %p40 = por %p38, %p39
      %p41 = scmp.ne.s32.totalorder %s30, %s33
      %p42 = scmp.eq.s32.totalorder %s25, 2
      %p43 = por %p41, %p42
      %p44 = scmp.ne.s32.totalorder %s33, %s34
      %p45 = scmp.eq.s32.totalorder %s25, 0
      %p46 = por %p44, %p45
      %p47 = scmp.ne.s32.totalorder %s33, %s34
      %p48 = scmp.eq.s32.totalorder %s26, 2
      %p49 = por %p47, %p48
      %p51 = scmp.ne.s32.totalorder %s34, %s50
      %p52 = scmp.eq.s32.totalorder %s26, 0
      %p53 = por %p51, %p52
      %s55 = sadd.s32 %s54, 1
      %p58 = scmp.eq.s32.totalorder %s20, 2
      %p59 = scmp.ne.s32.totalorder %s54, %s56
      %p60 = scmp.eq.s32.totalorder %s20, 0
      %p61 = por %p59, %p60
      %p62 = scmp.ne.s32.totalorder %s54, %s56
      %p63 = scmp.eq.s32.totalorder %s25, 2
      %p64 = por %p62, %p63
      %p65 = scmp.ne.s32.totalorder %s56, %s57
      %p66 = scmp.eq.s32.totalorder %s25, 0
      %p67 = por %p65, %p66
      %p68 = scmp.ne.s32.totalorder %s56, %s57
      %p69 = scmp.eq.s32.totalorder %s26, 2
      %p70 = por %p68, %p69
      %p72 = scmp.ne.s32.totalorder %s57, %s71
      %p73 = scmp.eq.s32.totalorder %s26, 0
      %p74 = por %p72, %p73
      %s76 = sadd.s32 %s75, 1
      %p79 = scmp.eq.s32.totalorder %s20, 2
      %p80 = scmp.ne.s32.totalorder %s75, %s77
      %p81 = scmp.eq.s32.totalorder %s20, 0
      %p82 = por %p80, %p81
      %p83 = scmp.ne.s32.totalorder %s75, %s77
      %p84 = scmp.eq.s32.totalorder %s25, 2
      %p85 = por %p83, %p84
      %p86 = scmp.ne.s32.totalorder %s77, %s78
      %p87 = scmp.eq.s32.totalorder %s25, 0
      %p88 = por %p86, %p87
      %p89 = scmp.ne.s32.totalorder %s77, %s78
      %p90 = scmp.eq.s32.totalorder %s26, 2
      %p91 = por %p89, %p90
      %p93 = scmp.ne.s32.totalorder %s78, %s92
      %p94 = scmp.eq.s32.totalorder %s26, 0
      %p95 = por %p93, %p94
      %s97 = sadd.s32 %s96, 1
      %p100 = scmp.eq.s32.totalorder %s20, 2
      %p101 = scmp.ne.s32.totalorder %s96, %s98
      %p102 = scmp.eq.s32.totalorder %s20, 0
      %p103 = por %p101, %p102
      %p104 = scmp.ne.s32.totalorder %s96, %s98
      %p105 = scmp.eq.s32.totalorder %s25, 2
      %p106 = por %p104, %p105
      %p107 = scmp.ne.s32.totalorder %s98, %s99
      %p108 = scmp.eq.s32.totalorder %s25, 0
      %p109 = por %p107, %p108
      %p110 = scmp.ne.s32.totalorder %s98, %s99
      %p111 = scmp.eq.s32.totalorder %s26, 2
      %p112 = por %p110, %p111
      %p114 = scmp.ne.s32.totalorder %s99, %s113
      %p115 = scmp.eq.s32.totalorder %s26, 0
      %p116 = por %p114, %p115
      %s118 = sadd.s32 %s117, 1
      %p121 = scmp.eq.s32.totalorder %s20, 2
      %p122 = scmp.ne.s32.totalorder %s117, %s119
      %p123 = scmp.eq.s32.totalorder %s20, 0
      %p124 = por %p122, %p123
      %p125 = scmp.ne.s32.totalorder %s117, %s119
      %p126 = scmp.eq.s32.totalorder %s25, 2
      %p127 = por %p125, %p126
      %p128 = scmp.ne.s32.totalorder %s119, %s120
      %p129 = scmp.eq.s32.totalorder %s25, 0
      %p130 = por %p128, %p129
      %p131 = scmp.ne.s32.totalorder %s119, %s120
      %p132 = scmp.eq.s32.totalorder %s26, 2
      %p133 = por %p131, %p132
      %p135 = scmp.ne.s32.totalorder %s120, %s134
      %p136 = scmp.eq.s32.totalorder %s26, 0
      %p137 = por %p135, %p136
      %s139 = sadd.s32 %s138, 1
      %p142 = scmp.eq.s32.totalorder %s20, 2
      %p143 = scmp.ne.s32.totalorder %s138, %s140
      %p144 = scmp.eq.s32.totalorder %s20, 0
      %p145 = por %p143, %p144
      %p146 = scmp.ne.s32.totalorder %s138, %s140
      %p147 = scmp.eq.s32.totalorder %s25, 2
      %p148 = por %p146, %p147
      %p149 = scmp.ne.s32.totalorder %s140, %s141
      %p150 = scmp.eq.s32.totalorder %s25, 0
      %p151 = por %p149, %p150
      %p152 = scmp.ne.s32.totalorder %s140, %s141
      %p153 = scmp.eq.s32.totalorder %s26, 2
      %p154 = por %p152, %p153
      %p156 = scmp.ne.s32.totalorder %s141, %s155
      %p157 = scmp.eq.s32.totalorder %s26, 0
      %p158 = por %p156, %p157
      %s160 = sadd.s32 %s159, 1
      %p163 = scmp.eq.s32.totalorder %s20, 2
      %p164 = scmp.ne.s32.totalorder %s159, %s161
      %p165 = scmp.eq.s32.totalorder %s20, 0
      %p166 = por %p164, %p165
      %p167 = scmp.ne.s32.totalorder %s159, %s161
      %p168 = scmp.eq.s32.totalorder %s25, 2
      %p169 = por %p167, %p168
      %p170 = scmp.ne.s32.totalorder %s161, %s162
      %p171 = scmp.eq.s32.totalorder %s25, 0
      %p172 = por %p170, %p171
      %p173 = scmp.ne.s32.totalorder %s161, %s162
      %p174 = scmp.eq.s32.totalorder %s26, 2
      %p175 = por %p173, %p174
      %p177 = scmp.ne.s32.totalorder %s162, %s176
      %p178 = scmp.eq.s32.totalorder %s26, 0
      %p179 = por %p177, %p178
      %s181 = sadd.s32 %s180, 1
      %p184 = scmp.eq.s32.totalorder %s20, 2
      %p185 = scmp.ne.s32.totalorder %s180, %s182
      %p186 = scmp.eq.s32.totalorder %s20, 0
      %p187 = por %p185, %p186
      %p188 = scmp.ne.s32.totalorder %s180, %s182
      %p189 = scmp.eq.s32.totalorder %s25, 2
      %p190 = por %p188, %p189
      %p191 = scmp.ne.s32.totalorder %s182, %s183
      %p192 = scmp.eq.s32.totalorder %s25, 0
      %p193 = por %p191, %p192
      %p194 = scmp.ne.s32.totalorder %s182, %s183
      %p195 = scmp.eq.s32.totalorder %s26, 2
      %p196 = por %p194, %p195
      %p198 = scmp.ne.s32.totalorder %s183, %s197
      %p199 = scmp.eq.s32.totalorder %s26, 0
      %p200 = por %p198, %p199
      %s202 = sadd.s32 %s201, 1
      %p205 = scmp.eq.s32.totalorder %s20, 2
      %p206 = scmp.ne.s32.totalorder %s201, %s203
      %p207 = scmp.eq.s32.totalorder %s20, 0
      %p208 = por %p206, %p207
      %p209 = scmp.ne.s32.totalorder %s201, %s203
      %p210 = scmp.eq.s32.totalorder %s25, 2
      %p211 = por %p209, %p210
      %p212 = scmp.ne.s32.totalorder %s203, %s204
      %p213 = scmp.eq.s32.totalorder %s25, 0
      %p214 = por %p212, %p213
      %p215 = scmp.ne.s32.totalorder %s203, %s204
      %p216 = scmp.eq.s32.totalorder %s26, 2
      %p217 = por %p215, %p216
      %p219 = scmp.ne.s32.totalorder %s204, %s218
      %p220 = scmp.eq.s32.totalorder %s26, 0
      %p221 = por %p219, %p220
      %s222 = ssub.s32 %s20, %s27
      %p223 = scmp.eq.s32.totalorder %s222, 0
      %s225 = sadd.s32 %s224, 1
      %s226 = scalar_select %p223, %s224, %s225
      %p229 = pneg %p223
      %p230 = scmp.eq.s32.totalorder %s20, 2
      %p231 = por %p229, %p230
      %p232 = scmp.ne.s32.totalorder %s224, %s227
      %p233 = scmp.eq.s32.totalorder %s20, 0
      %p234 = por %p232, %p233
      %p235 = scmp.ne.s32.totalorder %s224, %s227
      %p236 = scmp.eq.s32.totalorder %s25, 2
      %p237 = por %p235, %p236
      %p238 = scmp.ne.s32.totalorder %s227, %s228
      %p239 = scmp.eq.s32.totalorder %s25, 0
      %p240 = por %p238, %p239
      %p241 = scmp.ne.s32.totalorder %s227, %s228
      %p242 = scmp.eq.s32.totalorder %s26, 2
      %p243 = por %p241, %p242
      %p245 = scmp.ne.s32.totalorder %s228, %s244
      %p246 = scmp.eq.s32.totalorder %s26, 0
      %p247 = por %p245, %p246
      %p248 = scmp.le.s32.totalorder 1, %s20
      %p249 = scmp.lt.s32.totalorder %s20, 4
      %p250 = pnand %p248, %p249
      %p251 = pneg %p250
      // Predicated region
      $region9: #{tpu_custom_call.1} parent=5 // pred_check
        _
      $region10: #{tpu_custom_call.1} parent=5 // pred_check_branch
        %253 = sbr.rel (%p250) target = $region12
      $region11: #{tpu_custom_call.1} parent=5 // pred_region
        %s254 = ssub.s32 %s20, 1
        // Predicated region
        $region13: #{tpu_custom_call.1} parent=11 // pred_check
          %p255 = pneg %p67
        $region14: #{tpu_custom_call.1} parent=11 // pred_check_branch
          %257 = sbr.rel (%p255) target = $region16
        $region15: #{tpu_custom_call.1} parent=11 // pred_region
          _
        $region16: #{tpu_custom_call.1} parent=11 // pred_fallthru
          _
        // Predicated region
        $region17: #{tpu_custom_call.1} parent=11 // pred_check
          %p258 = pneg %p88
        $region18: #{tpu_custom_call.1} parent=11 // pred_check_branch
          %260 = sbr.rel (%p258) target = $region20
        $region19: #{tpu_custom_call.1} parent=11 // pred_region
          _
        $region20: #{tpu_custom_call.1} parent=11 // pred_fallthru
          _
        // Predicated region
        $region21: #{tpu_custom_call.1} parent=11 // pred_check
          %p261 = pneg %p109
        $region22: #{tpu_custom_call.1} parent=11 // pred_check_branch
          %263 = sbr.rel (%p261) target = $region24
        $region23: #{tpu_custom_call.1} parent=11 // pred_region
          _
        $region24: #{tpu_custom_call.1} parent=11 // pred_fallthru
          _
        // Predicated region
        $region25: #{tpu_custom_call.1} parent=11 // pred_check
          %p264 = pneg %p130
        $region26: #{tpu_custom_call.1} parent=11 // pred_check_branch
          %266 = sbr.rel (%p264) target = $region28
        $region27: #{tpu_custom_call.1} parent=11 // pred_region
          _
        $region28: #{tpu_custom_call.1} parent=11 // pred_fallthru
          _
        // Predicated region
        $region29: #{tpu_custom_call.1} parent=11 // pred_check
          %p267 = pneg %p151
        $region30: #{tpu_custom_call.1} parent=11 // pred_check_branch
          %269 = sbr.rel (%p267) target = $region32
        $region31: #{tpu_custom_call.1} parent=11 // pred_region
          _
        $region32: #{tpu_custom_call.1} parent=11 // pred_fallthru
          _
        // Predicated region
        $region33: #{tpu_custom_call.1} parent=11 // pred_check
          %p270 = pneg %p172
        $region34: #{tpu_custom_call.1} parent=11 // pred_check_branch
          %272 = sbr.rel (%p270) target = $region36
        $region35: #{tpu_custom_call.1} parent=11 // pred_region
          _
        $region36: #{tpu_custom_call.1} parent=11 // pred_fallthru
          _
        // Predicated region
        $region37: #{tpu_custom_call.1} parent=11 // pred_check
          %p273 = pneg %p193
        $region38: #{tpu_custom_call.1} parent=11 // pred_check_branch
          %275 = sbr.rel (%p273) target = $region40
        $region39: #{tpu_custom_call.1} parent=11 // pred_region
          _
        $region40: #{tpu_custom_call.1} parent=11 // pred_fallthru
          _
        // Predicated region
        $region41: #{tpu_custom_call.1} parent=11 // pred_check
          %p276 = pneg %p214
        $region42: #{tpu_custom_call.1} parent=11 // pred_check_branch
          %278 = sbr.rel (%p276) target = $region44
        $region43: #{tpu_custom_call.1} parent=11 // pred_region
          _
        $region44: #{tpu_custom_call.1} parent=11 // pred_fallthru
          _
      $region12: #{tpu_custom_call.1} parent=5 // pred_fallthru
        _
      %p279 = scmp.lt.s32.totalorder %s20, 3
      // Predicated region
      $region45: #{tpu_custom_call.1} parent=5 // pred_check
        %p280 = pneg %p279
      $region46: #{tpu_custom_call.1} parent=5 // pred_check_branch
        %282 = sbr.rel (%p280) target = $region48
      $region47: #{tpu_custom_call.1} parent=5 // pred_region
        // Predicated region
        $region49: #{tpu_custom_call.1} parent=47 // pred_check
          %p283 = pneg %p40
        $region50: #{tpu_custom_call.1} parent=47 // pred_check_branch
          %285 = sbr.rel (%p283) target = $region52
        $region51: #{tpu_custom_call.1} parent=47 // pred_region
          %p286 = scmp.lt.s32.totalorder %s20, 2
          %s287 = scalar_select %p286, %s20, 2
          %s288 = smul.addr %s287, 4
          %s289 = scalar_lea.vmem %s0, %s288
        $region52: #{tpu_custom_call.1} parent=47 // pred_fallthru
          _
      $region48: #{tpu_custom_call.1} parent=5 // pred_fallthru
        _
      %p290 = scmp.le.s32.totalorder 1, %s20
      %p291 = scmp.lt.s32.totalorder %s20, 4
      %p292 = pnand %p290, %p291
      %p293 = pneg %p292
      // Predicated region
      $region53: #{tpu_custom_call.1} parent=5 // pred_check
        _
      $region54: #{tpu_custom_call.1} parent=5 // pred_check_branch
        %295 = sbr.rel (%p292) target = $region56
      $region55: #{tpu_custom_call.1} parent=5 // pred_region
        %s296 = ssub.s32 %s20, 1
        %p297 = scmp.lt.s32.totalorder %s25, 2
        %s298 = scalar_select %p297, %s25, 2
        %s299 = smul.addr %s298, 4
        %s300 = scalar_lea.vmem %s0, %s299
        %p301 = pneg %p46
        %p302 = pneg %p43
        %p303 = pneg %p67
        %p304 = pneg %p64
        %p305 = pneg %p88
        %p306 = pneg %p85
        %p307 = pneg %p109
        %p308 = pneg %p106
        %p309 = pneg %p130
        %p310 = pneg %p127
        %p311 = pneg %p151
        %p312 = pneg %p148
        %p313 = pneg %p172
        %p314 = pneg %p169
        %p315 = pneg %p193
        %p316 = pneg %p190
        %p317 = pneg %p214
        %p318 = pneg %p211
        %p319 = pneg %p240
        %p320 = pneg %p237
        %s321 = sand.u32 %s227, 1
        %s322 = scalar_lea.sflag [#allocation4], %s321
        %s323 = sand.u32 %s227, 1
        %s324 = scalar_lea.vmem [#allocation3], %s323
        %p325 = scmp.lt.s32.totalorder %s25, 2
        %s326 = scalar_select %p325, %s25, 2
        %s327 = smul.addr %s326, 4
        %s328 = scalar_lea.vmem %s0, %s327
        %v329 = vld [vmem:[%s328] sm:$0x7]
        %v330 = vld [vmem:[%s1] sm:$0xff]
        %v331 = vld [vmem:[%s1 + $0x8] sm:$0xff]
        %v332 = vld [vmem:[%s1 + $0x10] sm:$0xff]
        %334 = vset.pattern.permute.xlu0 0
        %335 = vperm.xlu0 %334, %v330
        %v336 = vpop.permute.xlu0 %335
        %339 = vset.pattern.permute.xlu0 0
        %340 = vperm.xlu0 %339, %v331
        %v341 = vpop.permute.xlu0 %340
        %344 = vset.pattern.permute.xlu0 0
        %345 = vperm.xlu0 %344, %v332
        %v346 = vpop.permute.xlu0 %345
        %v348 = vlaneseq
        %v349 = vshrl.u32 %v348, 7
        %v350 = vsub.s32 0, %v349
        %v351 = vrot.slane %v329, %v350
        %v352 = vmul.f32 %v336, %v351
        %v353 = vmul.f32 %v341, %v351
        %v354 = vmul.f32 %v346, %v351
        %355 = vset.pattern.permute.xlu0 1
        %356 = vperm.xlu0 %355, %v330
        %v357 = vpop.permute.xlu0 %356
        %359 = vset.pattern.permute.xlu0 1
        %360 = vperm.xlu0 %359, %v331
        %v361 = vpop.permute.xlu0 %360
        %363 = vset.pattern.permute.xlu0 1
        %364 = vperm.xlu0 %363, %v332
        %v365 = vpop.permute.xlu0 %364
        %v367 = vlaneseq
        %v368 = vshrl.u32 %v367, 7
        %v369 = vsub.s32 1, %v368
        %v370 = vrot.slane %v329, %v369
        %v371 = vmul.f32 %v357, %v370
        %v372 = vmul.f32 %v361, %v370
        %v373 = vmul.f32 %v365, %v370
        %v374 = vadd.f32 %v352, %v371
        %v375 = vadd.f32 %v353, %v372
        %v376 = vadd.f32 %v354, %v373
        %377 = vset.pattern.permute.xlu0 2
        %378 = vperm.xlu0 %377, %v330
        %v379 = vpop.permute.xlu0 %378
        %381 = vset.pattern.permute.xlu0 2
        %382 = vperm.xlu0 %381, %v331
        %v383 = vpop.permute.xlu0 %382
        %385 = vset.pattern.permute.xlu0 2
        %386 = vperm.xlu0 %385, %v332
        %v387 = vpop.permute.xlu0 %386
        %v389 = vlaneseq
        %v390 = vshrl.u32 %v389, 7
        %v391 = vsub.s32 2, %v390
        %v392 = vrot.slane %v329, %v391
        %v393 = vmul.f32 %v379, %v392
        %v394 = vmul.f32 %v383, %v392
        %v395 = vmul.f32 %v387, %v392
        %v396 = vadd.f32 %v374, %v393
        %v397 = vadd.f32 %v375, %v394
        %v398 = vadd.f32 %v376, %v395
        %v399 = vld [vmem:[%s2] sm:$0xff]
        %v400 = vld [vmem:[%s2 + $0x8] sm:$0xff]
        %v401 = vld [vmem:[%s2 + $0x10] sm:$0xff]
        %403 = vset.pattern.permute.xlu0 0
        %404 = vperm.xlu0 %403, %v399
        %v405 = vpop.permute.xlu0 %404
        %408 = vset.pattern.permute.xlu0 0
        %409 = vperm.xlu0 %408, %v400
        %v410 = vpop.permute.xlu0 %409
        %413 = vset.pattern.permute.xlu0 0
        %414 = vperm.xlu0 %413, %v401
        %v415 = vpop.permute.xlu0 %414
        %v417 = vadd.f32 %v396, %v405
        %v418 = vadd.f32 %v397, %v410
        %v419 = vadd.f32 %v398, %v415
        %v420 = vmax.f32 %v417, 0.0
        %v421 = vmax.f32 %v418, 0.0
        %v422 = vmax.f32 %v419, 0.0
        %v423 = vld [vmem:[%s3] sm:$0xff]
        %v424 = vld [vmem:[%s3 + $0x8] sm:$0xff]
        %v425 = vld [vmem:[%s3 + $0x10] sm:$0xff]
        %v426 = vld [vmem:[%s3 + $0x18] sm:$0xff]
        %v427 = vld [vmem:[%s3 + $0x20] sm:$0xff]
        %v428 = vld [vmem:[%s4] sm:$0xff]
        %v429 = vld [vmem:[%s4 + $0x8] sm:$0xff]
        %v430 = vld [vmem:[%s4 + $0x10] sm:$0xff]
        %v431 = vld [vmem:[%s4 + $0x18] sm:$0xff]
        %v432 = vld [vmem:[%s4 + $0x20] sm:$0xff]
        %434 = vset.pattern.permute.xlu0 0
        %435 = vperm.xlu0 %434, %v428
        %v436 = vpop.permute.xlu0 %435
        %439 = vset.pattern.permute.xlu0 0
        %440 = vperm.xlu0 %439, %v429
        %v441 = vpop.permute.xlu0 %440
        %444 = vset.pattern.permute.xlu0 0
        %445 = vperm.xlu0 %444, %v430
        %v446 = vpop.permute.xlu0 %445
        %449 = vset.pattern.permute.xlu0 0
        %450 = vperm.xlu0 %449, %v431
        %v451 = vpop.permute.xlu0 %450
        %454 = vset.pattern.permute.xlu0 0
        %455 = vperm.xlu0 %454, %v432
        %v456 = vpop.permute.xlu0 %455
        %vm458 = vcmask 195584
        %v460 = vsel %vm458, %v423, 0
        %v463 = vsel %vm458, %v424, 0
        %v466 = vsel %vm458, %v425, 0
        %v469 = vsel %vm458, %v426, 0
        %v472 = vsel %vm458, %v427, 0
        %474 = vmatprep.subr.mxu0 0.0
        %475 = vmatpush1.msra.mxu0 0.0
        %476 = vmatprep.subr.mxu0 0.0
        %477 = vmatpush1.msra.mxu0 0.0
        %478 = vmatprep.subr.mxu0 0.0
        %479 = vmatpush1.msra.mxu0 0.0
        %480 = vmatprep.subr.mxu0 0.0
        %481 = vmatpush1.msra.mxu0 0.0
        %482 = vmatprep.subr.mxu0 0.0
        %483 = vmatpush1.msra.mxu0 0.0
        %484 = vmatprep.subr.mxu0 0.0
        %485 = vmatpush1.msra.mxu0 0.0
        %486 = vmatprep.subr.mxu0 0.0
        %487 = vmatpush1.msra.mxu0 0.0
        %488 = vmatprep.subr.mxu0 0.0
        %489 = vmatpush1.msra.mxu0 0.0
        %490 = vmatprep.subr.mxu0 0.0
        %491 = vmatpush1.msra.mxu0 0.0
        %492 = vmatprep.subr.mxu0 0.0
        %493 = vmatpush1.msra.mxu0 0.0
        %494 = vmatprep.subr.mxu0 0.0
        %495 = vmatpush1.msra.mxu0 0.0
        %496 = vmatprep.subr.mxu0 0.0
        %497 = vmatpush1.msra.mxu0 0.0
        %498 = vmatprep.subr.mxu0 0.0
        %499 = vmatpush1.msra.mxu0 0.0
        %500 = vmatprep.subr.mxu0 0.0
        %501 = vmatpush1.msra.mxu0 %v422
        %502 = vmatprep.subr.mxu0 0.0
        %503 = vmatpush1.msra.mxu0 %v421
        %504 = vmatprep.subr.mxu0 0.0
        %505 = vmatpush1.msra.mxu0 %v420
        %506 = vmatprep.subr.mxu0 0.0
        %507 = vmatpush2.msra.mxu0 0.0
        %508 = vmatprep.subr.mxu0 0.0
        %509 = vmatpush2.msra.mxu0 0.0
        %510 = vmatprep.subr.mxu0 0.0
        %511 = vmatpush2.msra.mxu0 0.0
        %512 = vmatprep.subr.mxu0 0.0
        %513 = vmatpush2.msra.mxu0 0.0
        %514 = vmatprep.subr.mxu0 0.0
        %515 = vmatpush2.msra.mxu0 0.0
        %516 = vmatprep.subr.mxu0 0.0
        %517 = vmatpush2.msra.mxu0 0.0
        %518 = vmatprep.subr.mxu0 0.0
        %519 = vmatpush2.msra.mxu0 0.0
        %520 = vmatprep.subr.mxu0 0.0
        %521 = vmatpush2.msra.mxu0 0.0
        %522 = vmatprep.subr.mxu0 0.0
        %523 = vmatpush2.msra.mxu0 0.0
        %524 = vmatprep.subr.mxu0 0.0
        %525 = vmatpush2.msra.mxu0 0.0
        %526 = vmatprep.subr.mxu0 0.0
        %527 = vmatpush2.msra.mxu0 0.0
        %528 = vmatprep.subr.mxu0 0.0
        %529 = vmatpush2.msra.mxu0 0.0
        %530 = vmatprep.subr.mxu0 0.0
        %531 = vmatpush2.msra.mxu0 0.0
        %532 = vmatprep.subr.mxu0 0.0
        %533 = vmatpush2.msra.mxu0 0.0
        %534 = vmatprep.subr.mxu0 0.0
        %535 = vmatpush2.msra.mxu0 0.0
        %536 = vmatprep.subr.mxu0 0.0
        %537 = vmatpush2.msra.mxu0 0.0
        %538 = vmatprep.mubr.f32.mxu0 0.0
        %539 = vmatmul.mubr.f32.gmra.mxu0 %v460
        %v540 = vpop.f32.mrf.mxu0
        %v541 = vadd.f32 %v436, %v540
        %v542 = vpop.f32.mrf.mxu0
        %543 = vmatprep.mubr.f32.mxu0 0.0
        %544 = vmatmul.mubr.f32.gmra.mxu0 %v463
        %v545 = vpop.f32.mrf.mxu0
        %v546 = vadd.f32 %v441, %v545
        %v547 = vpop.f32.mrf.mxu0
        %548 = vmatprep.mubr.f32.mxu0 0.0
        %549 = vmatmul.mubr.f32.gmra.mxu0 %v466
        %v550 = vpop.f32.mrf.mxu0
        %v551 = vadd.f32 %v446, %v550
        %v552 = vpop.f32.mrf.mxu0
        %553 = vmatprep.mubr.f32.mxu0 0.0
        %554 = vmatmul.mubr.f32.gmra.mxu0 %v469
        %v555 = vpop.f32.mrf.mxu0
        %v556 = vadd.f32 %v451, %v555
        %v557 = vpop.f32.mrf.mxu0
        %558 = vmatprep.mubr.f32.mxu0 0.0
        %559 = vmatmul.mubr.f32.gmra.mxu0 %v472
        %v560 = vpop.f32.mrf.mxu0
        %v561 = vadd.f32 %v456, %v560
        %v562 = vpop.f32.mrf.mxu0
        %563 = vdwg.mxu0
        %v564 = vmax.f32 %v541, 0.0
        %v565 = vmax.f32 %v546, 0.0
        %v566 = vmax.f32 %v551, 0.0
        %v567 = vmax.f32 %v556, 0.0
        %v568 = vmax.f32 %v561, 0.0
        %v569 = vld [vmem:[%s5] sm:$0xff]
        %v570 = vld [vmem:[%s5 + $0x8] sm:$0xf]
        %v571 = vld [vmem:[%s6] sm:$0xff]
        %v572 = vld [vmem:[%s6 + $0x8] sm:$0xf]
        %574 = vset.pattern.permute.xlu0 0
        %575 = vperm.xlu0 %574, %v571
        %v576 = vpop.permute.xlu0 %575
        %579 = vset.pattern.permute.xlu0 0
        %580 = vperm.xlu0 %579, %v572
        %v581 = vpop.permute.xlu0 %580
        %vm583 = vcmask 326656
        %v585 = vsel %vm583, %v569, 0
        %v588 = vsel %vm583, %v570, 0
        %590 = vmatprep.subr.mxu0 0.0
        %591 = vmatpush1.msra.mxu0 0.0
        %592 = vmatprep.subr.mxu0 0.0
        %593 = vmatpush1.msra.mxu0 0.0
        %594 = vmatprep.subr.mxu0 0.0
        %595 = vmatpush1.msra.mxu0 0.0
        %596 = vmatprep.subr.mxu0 0.0
        %597 = vmatpush1.msra.mxu0 0.0
        %598 = vmatprep.subr.mxu0 0.0
        %599 = vmatpush1.msra.mxu0 0.0
        %600 = vmatprep.subr.mxu0 0.0
        %601 = vmatpush1.msra.mxu0 0.0
        %602 = vmatprep.subr.mxu0 0.0
        %603 = vmatpush1.msra.mxu0 0.0
        %604 = vmatprep.subr.mxu0 0.0
        %605 = vmatpush1.msra.mxu0 0.0
        %606 = vmatprep.subr.mxu0 0.0
        %607 = vmatpush1.msra.mxu0 0.0
        %608 = vmatprep.subr.mxu0 0.0
        %609 = vmatpush1.msra.mxu0 0.0
        %610 = vmatprep.subr.mxu0 0.0
        %611 = vmatpush1.msra.mxu0 0.0
        %612 = vmatprep.subr.mxu0 0.0
        %613 = vmatpush1.msra.mxu0 %v568
        %614 = vmatprep.subr.mxu0 0.0
        %615 = vmatpush1.msra.mxu0 %v567
        %616 = vmatprep.subr.mxu0 0.0
        %617 = vmatpush1.msra.mxu0 %v566
        %618 = vmatprep.subr.mxu0 0.0
        %619 = vmatpush1.msra.mxu0 %v565
        %620 = vmatprep.subr.mxu0 0.0
        %621 = vmatpush1.msra.mxu0 %v564
        %622 = vmatprep.subr.mxu0 0.0
        %623 = vmatpush2.msra.mxu0 0.0
        %624 = vmatprep.subr.mxu0 0.0
        %625 = vmatpush2.msra.mxu0 0.0
        %626 = vmatprep.subr.mxu0 0.0
        %627 = vmatpush2.msra.mxu0 0.0
        %628 = vmatprep.subr.mxu0 0.0
        %629 = vmatpush2.msra.mxu0 0.0
        %630 = vmatprep.subr.mxu0 0.0
        %631 = vmatpush2.msra.mxu0 0.0
        %632 = vmatprep.subr.mxu0 0.0
        %633 = vmatpush2.msra.mxu0 0.0
        %634 = vmatprep.subr.mxu0 0.0
        %635 = vmatpush2.msra.mxu0 0.0
        %636 = vmatprep.subr.mxu0 0.0
        %637 = vmatpush2.msra.mxu0 0.0
        %638 = vmatprep.subr.mxu0 0.0
        %639 = vmatpush2.msra.mxu0 0.0
        %640 = vmatprep.subr.mxu0 0.0
        %641 = vmatpush2.msra.mxu0 0.0
        %642 = vmatprep.subr.mxu0 0.0
        %643 = vmatpush2.msra.mxu0 0.0
        %644 = vmatprep.subr.mxu0 0.0
        %645 = vmatpush2.msra.mxu0 0.0
        %646 = vmatprep.subr.mxu0 0.0
        %647 = vmatpush2.msra.mxu0 0.0
        %648 = vmatprep.subr.mxu0 0.0
        %649 = vmatpush2.msra.mxu0 0.0
        %650 = vmatprep.subr.mxu0 0.0
        %651 = vmatpush2.msra.mxu0 0.0
        %652 = vmatprep.subr.mxu0 0.0
        %653 = vmatpush2.msra.mxu0 0.0
        %654 = vmatprep.mubr.f32.mxu0 0.0
        %655 = vmatmul.mubr.f32.gmra.mxu0 %v585
        %v656 = vpop.f32.mrf.mxu0
        %v657 = vadd.f32 %v576, %v656
        %v658 = vpop.f32.mrf.mxu0
        %659 = vmatprep.mubr.f32.mxu0 0.0
        %660 = vmatmul.mubr.f32.gmra.mxu0 %v588
        %v661 = vpop.f32.mrf.mxu0
        %v662 = vadd.f32 %v581, %v661
        %v663 = vpop.f32.mrf.mxu0
        %664 = vdwg.mxu0
        %v665 = vmax.f32 %v657, 0.0
        %v666 = vmax.f32 %v662, 0.0
        %v667 = vld [vmem:[%s7] sm:$0x1]
        %668 = vxpose.xlu0.b32.start [1/16] %v667, 128
        %669 = vxpose.xlu0.b32.cont [2/16] 0.0, 128
        %670 = vxpose.xlu0.b32.cont [3/16] 0.0, 128
        %671 = vxpose.xlu0.b32.cont [4/16] 0.0, 128
        %672 = vxpose.xlu0.b32.cont [5/16] 0.0, 128
        %673 = vxpose.xlu0.b32.cont [6/16] 0.0, 128
        %674 = vxpose.xlu0.b32.cont [7/16] 0.0, 128
        %675 = vxpose.xlu0.b32.cont [8/16] 0.0, 128
        %676 = vxpose.xlu0.b32.cont [9/16] 0.0, 128
        %677 = vxpose.xlu0.b32.cont [10/16] 0.0, 128
        %678 = vxpose.xlu0.b32.cont [11/16] 0.0, 128
        %679 = vxpose.xlu0.b32.cont [12/16] 0.0, 128
        %680 = vxpose.xlu0.b32.cont [13/16] 0.0, 128
        %681 = vxpose.xlu0.b32.cont [14/16] 0.0, 128
        %682 = vxpose.xlu0.b32.cont [15/16] 0.0, 128
        %683 = vxpose.xlu0.b32.end [16/16] 0.0, 128
        %v684 = vpop.trf.xlu0
        %v685 = vpop.trf.xlu0
        %v686 = vpop.trf.xlu0
        %v687 = vpop.trf.xlu0
        %v688 = vpop.trf.xlu0
        %v689 = vpop.trf.xlu0
        %v690 = vpop.trf.xlu0
        %v691 = vpop.trf.xlu0
        %v692 = vpop.trf.xlu0
        %v693 = vpop.trf.xlu0
        %v694 = vpop.trf.xlu0
        %v695 = vpop.trf.xlu0
        %v696 = vpop.trf.xlu0
        %v697 = vpop.trf.xlu0
        %v698 = vpop.trf.xlu0
        %v699 = vpop.trf.xlu0
        %701 = vset.pattern.permute.xlu0 0
        %702 = vperm.xlu0 %701, %v684
        %v703 = vpop.permute.xlu0 %702
        %706 = vset.pattern.permute.xlu0 0
        %707 = vperm.xlu0 %706, %v685
        %v708 = vpop.permute.xlu0 %707
        %v710 = vmul.f32 %v703, %v665
        %v711 = vmul.f32 %v708, %v666
        %vm712 = vcmask 1043456
        %v713 = vsel %vm712, %v711, 0.0
        %v714 = vadd.f32 %v710, %v713
        %v715 = vrot.slane %v714, 4
        %v716 = vadd.f32 %v714, %v715
        %v717 = vrot.slane %v716, 2
        %v718 = vadd.f32 %v716, %v717
        %v719 = vrot.slane %v718, 1
        %v720 = vadd.f32 %v718, %v719
        %v721 = vld [vmem:[#allocation2] sm:$0x1]
        %723 = vset.pattern.permute.xlu0 0
        %724 = vperm.xlu0 %723, %v721
        %v725 = vpop.permute.xlu0 %724
        %v727 = vlaneseq
        %v728 = vshrl.u32 %v727, 7
        %v729 = vsub.s32 0, %v728
        %v730 = vrot.slane %v725, %v729
        %v731 = vadd.f32 %v720, %v730
        %732 = vst [vmem:[%s324] sm:$0x1] %v731
        %s733 = sand.u32 %s227, 1
        %s734 = scalar_lea.sflag [#allocation4], %s733
        %s735 = sand.u32 %s227, 1
        %s736 = scalar_lea.vmem [#allocation3], %s735
        // Predicated region
        $region57: #{tpu_custom_call.1} parent=55 // pred_check
          %p737 = pneg %p237
        $region58: #{tpu_custom_call.1} parent=55 // pred_check_branch
          %739 = sbr.rel (%p737) target = $region60
        $region59: #{tpu_custom_call.1} parent=55 // pred_region
          %s741 = ssub.s32 16, 16
          %742 = vsyncadd %s734, %s741
          %s743 = smul.addr %s25, 16
          %s744 = scalar_lea.hbm %s9, %s743
          %s746 = sshll.u32 %s736, 4
          %s747 = int_to_ptr.vmem [resolvable:$true] %s746
          %749 = dma.vmem_to_hbm [thread:$0]  %s747, 16, %s744, %s734
        $region60: #{tpu_custom_call.1} parent=55 // pred_fallthru
          _
      $region56: #{tpu_custom_call.1} parent=5 // pred_fallthru
        _
      %p750 = scmp.le.s32.totalorder 2, %s20
      // Predicated region
      $region61: #{tpu_custom_call.1} parent=5 // pred_check
        %p751 = pneg %p750
      $region62: #{tpu_custom_call.1} parent=5 // pred_check_branch
        %753 = sbr.rel (%p751) target = $region64
      $region63: #{tpu_custom_call.1} parent=5 // pred_region
        %s754 = ssub.s32 %s20, 2
        // Predicated region
        $region65: #{tpu_custom_call.1} parent=63 // pred_check
          %p755 = pneg %p243
        $region66: #{tpu_custom_call.1} parent=63 // pred_check_branch
          %757 = sbr.rel (%p755) target = $region68
        $region67: #{tpu_custom_call.1} parent=63 // pred_region
          %s758 = sand.u32 %s228, 1
          %s759 = scalar_lea.sflag [#allocation4], %s758
          %s760 = sand.u32 %s228, 1
          %s761 = scalar_lea.vmem [#allocation3], %s760
          %762 = dma.done %s759, 16
        $region68: #{tpu_custom_call.1} parent=63 // pred_fallthru
          _
      $region64: #{tpu_custom_call.1} parent=5 // pred_fallthru
        _
    $region6: #{tpu_custom_call.1} parent=1 // loop_footer
      %s24 = sadd.s32 1, %s20
    $region7: #{tpu_custom_call.1} parent=1 // loop_footer_branch
      %19 = sbr.rel target = $region3
    $region8: #{tpu_custom_call.1} parent=1 // loop_exit
      _
    %763 = vsyncpa [#allocation4], 1
    %s764 = scalar_lea.sflag [#allocation4], 1
    %765 = vsyncpa %s764, 1

</llo_original>
